<compile_context>
chip_gen: v6e
topology: v6e:2x2x1
jax: 0.10.0
libtpu: 0.0.40
codegen_flags: <defaults>
</compile_context>

<pallas_src>
import math
import functools

import jax
import jax.numpy as jnp
from jax.experimental import pallas as pl
from jax.experimental.pallas import tpu as pltpu

NEG_LARGE = -1.0e30          # single safe mask value (no -inf - -inf NaNs)
LANE = 128


def _tpu_vmem_capacity():
    try:
        return int(pltpu.get_tpu_info().vmem_capacity_bytes)
    except Exception:
        return 64 * 1024 * 1024          # conservative (v7x-sized) fallback


_VMEM_CAP = _tpu_vmem_capacity()
# ~3/4 of physical VMEM: ~48 MiB on v7x (64 MiB parts), ~96 MiB on v5e/v6e (128 MiB).
VMEM_LIMIT = min(100 * 1024 * 1024, (_VMEM_CAP // 4) * 3)
# Larger seq tiles on 128 MiB parts (v5e/v6e): fewer grid steps, fuller MXU.
SEQ_TILE_TARGET = 256 if _VMEM_CAP >= 128 * 1024 * 1024 else 128


def _seq_tile(Lp, target=None):
    """Largest multiple-of-128 tile <= target that divides Lp (Lp is a 128-multiple)."""
    if target is None:
        target = SEQ_TILE_TARGET
    t = min(Lp, target)
    while Lp % t:
        t -= LANE
    return t


def _const_spec(shape):
    """BlockSpec for an operand whose block never changes across the grid.

    Buffered(1): constant-index blocks don't need a second pipeline buffer, which
    halves resident weight VMEM (important on v7x's 64 MiB VMEM, free elsewhere).
    """
    zeros = (0,) * len(shape)
    return pl.BlockSpec(shape, lambda *_: zeros, pipeline_mode=pl.Buffered(1))


def _layernorm(h, g, b, eps):
    mu = jnp.mean(h, axis=-1, keepdims=True)
    var = jnp.mean((h - mu) ** 2, axis=-1, keepdims=True)
    return (h - mu) * jax.lax.rsqrt(var + eps) * g + b


# ---------------------------------------------------------------------------
# Kernel 1: LayerNorm1 + fused QKV projection.  Grid: (batch, seq-tile).
# ---------------------------------------------------------------------------
def qkv_kernel(x_ref, g_ref, b_ref, w_ref, bias_ref, qkv_ref, *, eps):
    x = x_ref[0]                                          # (tl, D) f32
    h = _layernorm(x, g_ref[...], b_ref[...], eps)        # f32 elementwise
    qkv = jnp.dot(h.astype(jnp.bfloat16), w_ref[...],     # bf16 MXU, f32 accumulate
                  preferred_element_type=jnp.float32) + bias_ref[...]
    qkv_ref[0] = qkv.astype(jnp.bfloat16)                 # lane-dense (tl, 3D) store


def run_qkv(x, layer, eps):
    B, Lp, D = x.shape
    tl = _seq_tile(Lp)
    return pl.pallas_call(
        functools.partial(qkv_kernel, eps=eps),
        grid=(B, Lp // tl),
        in_specs=[
            pl.BlockSpec((1, tl, D), lambda b, t: (b, t, 0)),
            _const_spec((1, D)), _const_spec((1, D)),            # ln1 g/b
            _const_spec((D, 3 * D)), _const_spec((1, 3 * D)),    # w_qkv, b_qkv
        ],
        out_specs=pl.BlockSpec((1, tl, 3 * D), lambda b, t: (b, t, 0)),
        out_shape=jax.ShapeDtypeStruct((B, Lp, 3 * D), jnp.bfloat16),
        compiler_params=pltpu.CompilerParams(
            dimension_semantics=("parallel", "parallel"),
            vmem_limit_bytes=VMEM_LIMIT),
    )(x, layer['ln1_g'], layer['ln1_b'], layer['w_qkv'], layer['b_qkv'])


# ---------------------------------------------------------------------------
# Kernel 2: attention + output proj + residual + LN2 + MLP + residual.
# Grid: (batch, query-tile).  Q/K/V arrive lane-dense (tq, D)/(Lp, D) straight
# from the QKV slab; heads are split with static lane slices inside VMEM.
# ---------------------------------------------------------------------------
def attn_mlp_kernel(pad_ref, x_ref, q_ref, k_ref, v_ref,
                    w_o_ref, b_o_ref, ln2_g_ref, ln2_b_ref,
                    w_fc_ref, b_fc_ref, w_pr_ref, b_pr_ref,
                    o_ref, *, eps, n_head):
    qt = pl.program_id(1)
    x = x_ref[0]            # (tq, D)  f32 residual stream
    q = q_ref[0]            # (tq, D)  bf16  (1/sqrt(hd) already folded into W_q)
    k = k_ref[0]            # (Lp, D)  bf16, lane-dense full-length keys
    v = v_ref[0]            # (Lp, D)  bf16
    pad = pad_ref[0]        # (1, Lp)  f32, 1.0 at pad tokens

    tq, D = x.shape
    Lp = k.shape[0]
    hd = D // n_head

    # Causal + pad mask, computed once and reused for every head.
    row = jax.lax.broadcasted_iota(jnp.int32, (tq, Lp), 0) + qt * tq
    col = jax.lax.broadcasted_iota(jnp.int32, (tq, Lp), 1)
    valid = (col <= row) & (pad < 0.5)                                 # (tq, Lp)

    # Per-head attention.  Only one (tq, Lp) f32 score tile is live at a time
    # (vs an (H, tq, Lp) tensor), and K/V stay lane-dense in VMEM.
    # TODO(synk): flash-style KV streaming (online softmax over KV tiles) for
    #             long sequences on v7x's 64 MiB VMEM.
    heads = []
    for h in range(n_head):
        sl = slice(h * hd, (h + 1) * hd)
        qh, kh, vh = q[:, sl], k[:, sl], v[:, sl]                      # (tq,hd)/(Lp,hd)
        s = jax.lax.dot_general(qh, kh, (((1,), (1,)), ((), ())),
                                preferred_element_type=jnp.float32)   # (tq, Lp)
        s = jnp.where(valid, s, NEG_LARGE)
        s = s - jnp.max(s, axis=-1, keepdims=True)
        p = jnp.exp(s)        # TODO(synk): bf16 exp path on v6e/v7x EUP (keep f32 on v5e)
        p = p * pl.reciprocal(jnp.sum(p, axis=-1, keepdims=True), approx=True)
        heads.append(jnp.dot(p.astype(jnp.bfloat16), vh,
                             preferred_element_type=jnp.float32))      # (tq, hd)

    # Merge heads along lanes -> single K=D output projection on the MXU
    # (no (H, tq, D) f32 intermediate, no H-way VALU reduction).
    ctx = jnp.concatenate(heads, axis=-1)                              # (tq, D) f32
    attn = jnp.dot(ctx.astype(jnp.bfloat16), w_o_ref[...],
                   preferred_element_type=jnp.float32) + b_o_ref[...]
    x1 = x + attn                                                      # resid dropout = id

    # LN2 + MLP (gelu_new); tanh hits the EUP, elementwise stays f32.
    # TODO(synk): F-tiled MLP (stream w_fc/w_pr chunks) for GPT2-medium/large on v7x.
    h2 = _layernorm(x1, ln2_g_ref[...], ln2_b_ref[...], eps)
    a = jnp.dot(h2.astype(jnp.bfloat16), w_fc_ref[...],
                preferred_element_type=jnp.float32) + b_fc_ref[...]
    a = 0.5 * a * (1.0 + jnp.tanh(math.sqrt(2.0 / math.pi) * (a + 0.044715 * a ** 3)))
    m = jnp.dot(a.astype(jnp.bfloat16), w_pr_ref[...],
                preferred_element_type=jnp.float32) + b_pr_ref[...]
    o_ref[0] = x1 + m


def run_attn_mlp(x, qkv, is_pad, layer, n_head, eps):
    B, Lp, D = x.shape
    F_ = layer['w_fc'].shape[1]
    tq = _seq_tile(Lp)
    # Lane-aligned D lets us slice the (B, Lp, 3D) slab into Q/K/V blocks directly.
    assert D % LANE == 0, "n_embd must be a multiple of 128 for lane-dense QKV slicing"

    in_specs = [
        pl.BlockSpec((1, 1, Lp), lambda b, t: (b, 0, 0)),     # is_pad
        pl.BlockSpec((1, tq, D), lambda b, t: (b, t, 0)),     # residual x tile
        # Q/K/V are block-columns 0/1/2 of the QKV slab: no XLA transpose, no
        # extra HBM pass, K/V stay lane-dense.
        pl.BlockSpec((1, tq, D), lambda b, t: (b, t, 0)),     # Q tile
        pl.BlockSpec((1, Lp, D), lambda b, t: (b, 0, 1)),     # K (full length)
        pl.BlockSpec((1, Lp, D), lambda b, t: (b, 0, 2)),     # V (full length)
        _const_spec((D, D)), _const_spec((1, D)),             # w_o, b_o
        _const_spec((1, D)), _const_spec((1, D)),             # ln2 g/b
        _const_spec((D, F_)), _const_spec((1, F_)),           # w_fc, b_fc
        _const_spec((F_, D)), _const_spec((1, D)),            # w_pr, b_pr
    ]
    return pl.pallas_call(
        functools.partial(attn_mlp_kernel, eps=eps, n_head=n_head),
        grid=(B, Lp // tq),
        in_specs=in_specs,
        out_specs=pl.BlockSpec((1, tq, D), lambda b, t: (b, t, 0)),
        out_shape=jax.ShapeDtypeStruct((B, Lp, D), jnp.float32),
        compiler_params=pltpu.CompilerParams(
            dimension_semantics=("parallel", "parallel"),
            vmem_limit_bytes=VMEM_LIMIT),
    )(is_pad, x, qkv, qkv, qkv,
      layer['w_o'], layer['b_o'], layer['ln2_g'], layer['ln2_b'],
      layer['w_fc'], layer['b_fc'], layer['w_pr'], layer['b_pr'])


# ---------------------------------------------------------------------------
# Final LayerNorm, tiled over (batch, seq-tile).
# ---------------------------------------------------------------------------
def ln_kernel(x_ref, g_ref, b_ref, o_ref, *, eps):
    o_ref[0] = _layernorm(x_ref[0], g_ref[...], b_ref[...], eps)


def final_ln(x, g, b, eps):
    B, Lp, D = x.shape
    tl = _seq_tile(Lp)
    return pl.pallas_call(
        functools.partial(ln_kernel, eps=eps),
        grid=(B, Lp // tl),
        in_specs=[pl.BlockSpec((1, tl, D), lambda b, t: (b, t, 0)),
                  _const_spec((1, D)), _const_spec((1, D))],
        out_specs=pl.BlockSpec((1, tl, D), lambda b, t: (b, t, 0)),
        out_shape=jax.ShapeDtypeStruct((B, Lp, D), jnp.float32),
        compiler_params=pltpu.CompilerParams(
            dimension_semantics=("parallel", "parallel"),
            vmem_limit_bytes=VMEM_LIMIT),
    )(x, g, b)


# ---------------------------------------------------------------------------
# Parameters (synthetic, following GPT2._init_weights) and forward pass.
# ---------------------------------------------------------------------------
def init_params(key, cfg):
    """std=0.02, zero biases, LN weight=1/bias=0, c_proj std=0.02/sqrt(2*n_layer),
    pad row of wte zeroed.  Matmul weights stored bf16 (MXU-native).
    The 1/sqrt(hd) attention scale is folded into the Q columns of w_qkv
    (math-identical; removes an (H,tq,L)-sized VALU multiply from the kernel)."""
    V, D = cfg['vocab_size'], cfg['n_embd']
    P, S = cfg['n_positions'], cfg['segment_size']
    F_ = cfg['n_inner']
    H = cfg['n_head']
    hd = D // H
    n_layer = cfg['n_layer']
    std = 0.02
    proj_std = 0.02 / math.sqrt(2 * n_layer)
    attn_scale = 1.0 / math.sqrt(hd)

    def nrm(k, shape, s):
        return (s * jax.random.normal(k, shape)).astype(jnp.float32)

    keys = jax.random.split(key, 3 + 4 * n_layer)
    wte = nrm(keys[0], (V, D), std).at[cfg['pad_idx']].set(0.0)
    wpe = nrm(keys[1], (P, D), std)
    wse = nrm(keys[2], (S, D), std)
    layers = []
    for i in range(n_layer):
        k0, k1, k2, k3 = keys[3 + 4 * i: 7 + 4 * i]
        w_qkv = nrm(k0, (D, 3 * D), std).at[:, :D].multiply(attn_scale)
        layers.append(dict(
            ln1_g=jnp.ones((1, D), jnp.float32), ln1_b=jnp.zeros((1, D), jnp.float32),
            w_qkv=w_qkv.astype(jnp.bfloat16),
            b_qkv=jnp.zeros((1, 3 * D), jnp.float32),   # (zero; Q part would need scaling too)
            w_o=nrm(k1, (D, D), proj_std).astype(jnp.bfloat16),
            b_o=jnp.zeros((1, D), jnp.float32),
            ln2_g=jnp.ones((1, D), jnp.float32), ln2_b=jnp.zeros((1, D), jnp.float32),
            w_fc=nrm(k2, (D, F_), std).astype(jnp.bfloat16),
            b_fc=jnp.zeros((1, F_), jnp.float32),
            w_pr=nrm(k3, (F_, D), proj_std).astype(jnp.bfloat16),
            b_pr=jnp.zeros((1, D), jnp.float32),
        ))
    return dict(wte=wte, wpe=wpe, wse=wse, layers=layers,
                lnf_g=jnp.ones((1, D), jnp.float32),
                lnf_b=jnp.zeros((1, D), jnp.float32))


def gpt2_forward(params, inputs, cfg, segment_ids=None):
    """GPT2.forward: (B, L) int token ids -> (B, L, D) float32 hidden states."""
    B, L = inputs.shape
    n_head, eps = cfg['n_head'], cfg['layer_norm_epsilon']
    if segment_ids is None:
        segment_ids = jnp.zeros_like(inputs)
    is_pad = (inputs == cfg['pad_idx']).astype(jnp.float32)            # (B, L)
    # Embeddings: word + position + segment (gathers are XLA glue).
    x = (params['wte'][inputs]
         + params['wpe'][jnp.arange(L)][None, :, :]
         + params['wse'][segment_ids])
    # Pad the sequence to a multiple of 128: every BlockSpec tile is (8,128)-aligned
    # (lane-dense, unmasked stores).  Padded positions are masked as keys via is_pad
    # and sliced off at the end; padded query rows never feed real outputs.
    Lp = ((L + LANE - 1) // LANE) * LANE
    if Lp != L:
        x = jnp.pad(x, ((0, 0), (0, Lp - L), (0, 0)))
        is_pad = jnp.pad(is_pad, ((0, 0), (0, Lp - L)), constant_values=1.0)
    is_pad = is_pad[:, None, :]                                        # (B, 1, Lp)
    # TODO(synk): embd/attn/resid dropout are identity in eval mode and are omitted.
    # TODO(synk): cross-layer weight prefetch (P10 cross-call DMA futures) not implemented.
    for layer in params['layers']:
        qkv = run_qkv(x, layer, eps)
        x = run_attn_mlp(x, qkv, is_pad, layer, n_head, eps)
    x = final_ln(x, params['lnf_g'], params['lnf_b'], eps)
    return x[:, :L]


if __name__ == "__main__":
    cfg = dict(vocab_size=512, n_embd=128, n_head=4, n_positions=16,
               n_layer=2, n_inner=512, segment_size=3, pad_idx=0,
               layer_norm_epsilon=1e-5)
    B, L = 2, 8
    key = jax.random.PRNGKey(0)
    key, pk, ik = jax.random.split(key, 3)
    params = init_params(pk, cfg)
    inputs = jax.random.randint(ik, (B, L), 0, cfg['vocab_size'], dtype=jnp.int32)

    out = jax.block_until_ready(gpt2_forward(params, inputs, cfg))
    assert out.shape == (B, L, cfg['n_embd'])
    assert bool(jnp.all(jnp.isfinite(out)))
    print("KERNEL_OK")
</pallas_src>

<mosaic_0001>
module attributes {stable_mosaic.version = 11 : i64} {
  func.func @qkv_kernel(%arg0: i32, %arg1: i32, %arg2: memref<1x128x128xf32, #tpu.memory_space<vmem>>, %arg3: memref<1x128xf32, #tpu.memory_space<vmem>>, %arg4: memref<1x128xf32, #tpu.memory_space<vmem>>, %arg5: memref<128x384xbf16, #tpu.memory_space<vmem>>, %arg6: memref<1x384xf32, #tpu.memory_space<vmem>>, %arg7: memref<1x128x384xbf16, #tpu.memory_space<vmem>>) attributes {dimension_semantics = [#tpu.dimension_semantics<parallel>, #tpu.dimension_semantics<parallel>], iteration_bounds = array<i64: 2, 1>, scalar_prefetch = 0 : i64, scratch_operands = 0 : i64, tpu.core_type = #tpu.core_type<tc>, window_params = [{transform_indices = @transform_0, window_bounds = array<i64: 1, 128, 128>}, {pipeline_mode = #tpu.pipeline_mode<synchronous>, transform_indices = @transform_1, window_bounds = array<i64: 1, 128>}, {pipeline_mode = #tpu.pipeline_mode<synchronous>, transform_indices = @transform_2, window_bounds = array<i64: 1, 128>}, {pipeline_mode = #tpu.pipeline_mode<synchronous>, transform_indices = @transform_3, window_bounds = array<i64: 128, 384>}, {pipeline_mode = #tpu.pipeline_mode<synchronous>, transform_indices = @transform_4, window_bounds = array<i64: 1, 384>}, {transform_indices = @transform_5, window_bounds = array<i64: 1, 128, 384>}]} {
    %c0 = arith.constant 0 : index
    %c0_0 = arith.constant 0 : index
    %c0_1 = arith.constant 0 : index
    %0 = vector.load %arg2[%c0, %c0_0, %c0_1] : memref<1x128x128xf32, #tpu.memory_space<vmem>>, vector<1x128x128xf32>
    %1 = vector.shape_cast %0 : vector<1x128x128xf32> to vector<128x128xf32>
    %c0_2 = arith.constant 0 : index
    %c0_3 = arith.constant 0 : index
    %2 = vector.load %arg3[%c0_2, %c0_3] : memref<1x128xf32, #tpu.memory_space<vmem>>, vector<1x128xf32>
    %c0_4 = arith.constant 0 : index
    %c0_5 = arith.constant 0 : index
    %3 = vector.load %arg4[%c0_4, %c0_5] : memref<1x128xf32, #tpu.memory_space<vmem>>, vector<1x128xf32>
    %cst = arith.constant dense<0.000000e+00> : vector<128xf32>
    %4 = vector.multi_reduction <add>, %1, %cst [1] : vector<128x128xf32> to vector<128xf32>
    %5 = vector.shape_cast %4 : vector<128xf32> to vector<128x1xf32>
    %cst_6 = arith.constant 1.280000e+02 : f32
    %6 = vector.broadcast %cst_6 : f32 to vector<128x1xf32>
    %7 = arith.divf %5, %6 : vector<128x1xf32>
    %8 = vector.broadcast %7 : vector<128x1xf32> to vector<128x128xf32>
    %9 = arith.subf %1, %8 : vector<128x128xf32>
    %10 = arith.mulf %9, %9 : vector<128x128xf32>
    %cst_7 = arith.constant dense<0.000000e+00> : vector<128xf32>
    %11 = vector.multi_reduction <add>, %10, %cst_7 [1] : vector<128x128xf32> to vector<128xf32>
    %12 = vector.shape_cast %11 : vector<128xf32> to vector<128x1xf32>
    %cst_8 = arith.constant 1.280000e+02 : f32
    %13 = vector.broadcast %cst_8 : f32 to vector<128x1xf32>
    %14 = arith.divf %12, %13 : vector<128x1xf32>
    %15 = vector.broadcast %7 : vector<128x1xf32> to vector<128x128xf32>
    %16 = arith.subf %1, %15 : vector<128x128xf32>
    %cst_9 = arith.constant 9.99999974E-6 : f32
    %17 = vector.broadcast %cst_9 : f32 to vector<128x1xf32>
    %18 = arith.addf %14, %17 : vector<128x1xf32>
    %19 = math.rsqrt %18 : vector<128x1xf32>
    %20 = vector.broadcast %19 : vector<128x1xf32> to vector<128x128xf32>
    %21 = arith.mulf %16, %20 : vector<128x128xf32>
    %22 = vector.broadcast %2 : vector<1x128xf32> to vector<128x128xf32>
    %23 = arith.mulf %21, %22 : vector<128x128xf32>
    %24 = vector.broadcast %3 : vector<1x128xf32> to vector<128x128xf32>
    %25 = arith.addf %23, %24 : vector<128x128xf32>
    %26 = arith.truncf %25 : vector<128x128xf32> to vector<128x128xbf16>
    %c0_10 = arith.constant 0 : index
    %c0_11 = arith.constant 0 : index
    %27 = vector.load %arg5[%c0_10, %c0_11] : memref<128x384xbf16, #tpu.memory_space<vmem>>, vector<128x384xbf16>
    %cst_12 = arith.constant dense<0.000000e+00> : vector<128x384xf32>
    %28 = tpu.matmul %26, %27, %cst_12 {dimension_numbers = #tpu.dot_dimension_numbers<[1], [0], [0], [1], [0, 0, 1, 1], [], []>} : vector<128x128xbf16>, vector<128x384xbf16>, vector<128x384xf32> -> vector<128x384xf32>
    %c0_13 = arith.constant 0 : index
    %c0_14 = arith.constant 0 : index
    %29 = vector.load %arg6[%c0_13, %c0_14] : memref<1x384xf32, #tpu.memory_space<vmem>>, vector<1x384xf32>
    %30 = vector.broadcast %29 : vector<1x384xf32> to vector<128x384xf32>
    %31 = arith.addf %28, %30 : vector<128x384xf32>
    %32 = arith.truncf %31 : vector<128x384xf32> to vector<128x384xbf16>
    %c0_15 = arith.constant 0 : index
    %c0_16 = arith.constant 0 : index
    %c0_17 = arith.constant 0 : index
    %33 = vector.load %arg7[%c0_15, %c0_16, %c0_17] : memref<1x128x384xbf16, #tpu.memory_space<vmem>>, vector<1x128x384xbf16>
    %34 = vector.shape_cast %33 : vector<1x128x384xbf16> to vector<128x384xbf16>
    %35 = vector.shape_cast %32 : vector<128x384xbf16> to vector<1x128x384xbf16>
    tpu.vector_store %arg7[%c0_15, %c0_16, %c0_17], %35 {strides = array<i32>} : memref<1x128x384xbf16, #tpu.memory_space<vmem>>, vector<1x128x384xbf16>,
    return
  }
  func.func @transform_0(%arg0: i32, %arg1: i32) -> (i32, i32, i32) {
    %c0_i32 = arith.constant 0 : i32
    %c0_i32_0 = arith.constant 0 : i32
    return %arg0, %arg1, %c0_i32 : i32, i32, i32
  }
  func.func @transform_1(%arg0: i32, %arg1: i32) -> (i32, i32) {
    %c0_i32 = arith.constant 0 : i32
    %c0_i32_0 = arith.constant 0 : i32
    %c0_i32_1 = arith.constant 0 : i32
    return %c0_i32, %c0_i32_0 : i32, i32
  }
  func.func @transform_2(%arg0: i32, %arg1: i32) -> (i32, i32) {
    %c0_i32 = arith.constant 0 : i32
    %c0_i32_0 = arith.constant 0 : i32
    %c0_i32_1 = arith.constant 0 : i32
    return %c0_i32, %c0_i32_0 : i32, i32
  }
  func.func @transform_3(%arg0: i32, %arg1: i32) -> (i32, i32) {
    %c0_i32 = arith.constant 0 : i32
    %c0_i32_0 = arith.constant 0 : i32
    %c0_i32_1 = arith.constant 0 : i32
    return %c0_i32, %c0_i32_0 : i32, i32
  }
  func.func @transform_4(%arg0: i32, %arg1: i32) -> (i32, i32) {
    %c0_i32 = arith.constant 0 : i32
    %c0_i32_0 = arith.constant 0 : i32
    %c0_i32_1 = arith.constant 0 : i32
    return %c0_i32, %c0_i32_0 : i32, i32
  }
  func.func @transform_5(%arg0: i32, %arg1: i32) -> (i32, i32, i32) {
    %c0_i32 = arith.constant 0 : i32
    %c0_i32_0 = arith.constant 0 : i32
    return %arg0, %arg1, %c0_i32 : i32, i32, i32
  }
}

</mosaic_0001>

<llo_original>
// kernel: tpu_custom_call.1
$region0: #{tpu_custom_call.1}
  #allocation0 [shape = 'u32[]', space=smem, size = 0x4, offset = 0x4, fixed_abs, tag = 'smem constant byte address 0x4 - core index']
  #allocation1 [shape = 'u32[144,128]{1,0:T(1,128)}', space=vmem, size = 0x12000, scoped, tag = 'internal scratch']
  %s0 = inlined_call_operand.hbm [shape: f32[2,128,128], index: 0, kind: input, shape index: {}]
  %s1 = inlined_call_operand.vmem [shape: f32[1,128], index: 1, kind: input, shape index: {}]
  %s2 = inlined_call_operand.vmem [shape: f32[1,128], index: 2, kind: input, shape index: {}]
  %s3 = inlined_call_operand.hbm [shape: bf16[128,384], index: 3, kind: input, shape index: {}]
  %s4 = inlined_call_operand.vmem [shape: f32[1,384], index: 4, kind: input, shape index: {}]
  %s5 = inlined_call_operand.hbm [shape: bf16[2,128,384], index: 5, kind: output, shape index: {}]
  %s6 = sld [smem:[#allocation0]]
  $region61: #{tpu_custom_call.1} parent=0
    _
  %s8 = ssub.s32 1, %s6
  %s9 = scalar_select 0, %s8, %s6
  $region1: #{tpu_custom_call.1} parent=0
    #allocation2 [shape = 'u8[131072]{0}', space=vmem, size = 0x20000, scoped, tag = 'input window, operand 0']
    #allocation3 [shape = 's32[2]{0}', space=sflag, size = 0x8, scoped, tag = 'scoped memory for tpu_custom_call.1']
    #allocation4 [shape = 's32[2]{0}', space=sflag, size = 0x8, scoped, tag = 'scoped memory for tpu_custom_call.1']
    #allocation5 [shape = 'u8[98304]{0}', space=vmem, size = 0x18000, scoped, tag = 'input window, operand 3, single buffered']
    #allocation6 [shape = 's32[1]{0}', space=sflag, size = 0x4, scoped, tag = 'scoped memory for tpu_custom_call.1']
    #allocation7 [shape = 'u8[196608]{0}', space=vmem, size = 0x30000, scoped, tag = 'output window, operand 0']
    %10 = vsyncpa [#allocation3], 0
    %s11 = scalar_lea.sflag [#allocation3], 1
    %12 = vsyncpa %s11, 0
    %13 = vsyncpa [#allocation6], 0
    %14 = vsyncpa [#allocation4], 0
    %s15 = scalar_lea.sflag [#allocation4], 1
    %16 = vsyncpa %s15, 0
    loop: start=0, step=1, limit=4
    $region2: #{tpu_custom_call.1} parent=1 // loop_pre_header
      _
    $region3: #{tpu_custom_call.1} parent=1 // loop_header
      %s18 = sphi 0, %s22
      %p19 = scmp.ge.s32.totalorder %s18, 4
      %s25 = sphi 0, %s37
      %s26 = sphi 0, %s33
      %s27 = sphi 0, %s25
      %s28 = sphi 0, %s26
      %s29 = sphi 0, %s27
      %s30 = sphi 0, %s28
      %s42 = sphi 0, %s44
      %s45 = sphi 0, %s42
      %s46 = sphi 0, %s45
      %s62 = sphi 0, %s46
      %s66 = sphi 0, %s66
      %s68 = sphi 0, %s66
      %s69 = sphi 0, %s68
      %s83 = sphi 0, %s69
      %s87 = sphi 0, %s87
      %s89 = sphi 0, %s87
      %s90 = sphi 0, %s89
      %s104 = sphi 0, %s90
      %s108 = sphi 0, %s108
      %s110 = sphi 0, %s108
      %s111 = sphi 0, %s110
      %s125 = sphi 0, %s111
      %s129 = sphi 0, %s129
      %s131 = sphi 0, %s129
      %s132 = sphi 0, %s131
      %s146 = sphi 0, %s132
      %s154 = sphi 0, %s156
      %s157 = sphi 0, %s154
      %s158 = sphi 0, %s157
      %s174 = sphi 0, %s158
    $region4: #{tpu_custom_call.1} parent=1 // loop_header_branch
      %21 = sbr.rel (%p19) target = $region8
    $region5: #{tpu_custom_call.1} parent=1 // loop_body
      %s23 = ssub.s32 %s18, 1
      %s24 = ssub.s32 %s18, 2
      %s31 = sadd.s32 1, %s26
      %p32 = scmp.ge.s32.totalorder %s31, 1
      %s33 = scalar_select %p32, 0, %s31
      %s34 = sadd.s32 1, %s25
      %s35 = scalar_select %p32, %s34, %s25
      %p36 = scmp.ge.s32.totalorder %s35, 2
      %s37 = scalar_select %p36, 0, %s35
      %s38 = ssub.s32 %s25, %s37
      %s39 = ssub.s32 %s26, %s33
      %s40 = sor.u32 %s38, %s39
      %p41 = scmp.eq.s32.totalorder %s40, 0
      %s43 = sadd.s32 %s42, 1
      %s44 = scalar_select %p41, %s42, %s43
      %p47 = pneg %p41
      %p48 = scmp.eq.s32.totalorder %s18, 1
      %p49 = por %p47, %p48
      %p50 = scmp.ne.s32.totalorder %s42, %s45
      %p51 = scmp.eq.s32.totalorder %s18, 0
      %p52 = por %p50, %p51
      %p53 = scmp.ne.s32.totalorder %s42, %s45
      %p54 = scmp.eq.s32.totalorder %s23, 1
      %p55 = por %p53, %p54
      %p56 = scmp.ne.s32.totalorder %s45, %s46
      %p57 = scmp.eq.s32.totalorder %s23, 0
      %p58 = por %p56, %p57
      %p59 = scmp.ne.s32.totalorder %s45, %s46
      %p60 = scmp.eq.s32.totalorder %s24, 1
      %p61 = por %p59, %p60
      %p63 = scmp.ne.s32.totalorder %s46, %s62
      %p64 = scmp.eq.s32.totalorder %s24, 0
      %p65 = por %p63, %p64
      %s67 = sadd.s32 %s66, 1
      %p70 = scmp.eq.s32.totalorder %s18, 1
      %p71 = scmp.ne.s32.totalorder %s66, %s68
      %p72 = scmp.eq.s32.totalorder %s18, 0
      %p73 = por %p71, %p72
      %p74 = scmp.ne.s32.totalorder %s66, %s68
      %p75 = scmp.eq.s32.totalorder %s23, 1
      %p76 = por %p74, %p75
      %p77 = scmp.ne.s32.totalorder %s68, %s69
      %p78 = scmp.eq.s32.totalorder %s23, 0
      %p79 = por %p77, %p78
      %p80 = scmp.ne.s32.totalorder %s68, %s69
      %p81 = scmp.eq.s32.totalorder %s24, 1
      %p82 = por %p80, %p81
      %p84 = scmp.ne.s32.totalorder %s69, %s83
      %p85 = scmp.eq.s32.totalorder %s24, 0
      %p86 = por %p84, %p85
      %s88 = sadd.s32 %s87, 1
      %p91 = scmp.eq.s32.totalorder %s18, 1
      %p92 = scmp.ne.s32.totalorder %s87, %s89
      %p93 = scmp.eq.s32.totalorder %s18, 0
      %p94 = por %p92, %p93
      %p95 = scmp.ne.s32.totalorder %s87, %s89
      %p96 = scmp.eq.s32.totalorder %s23, 1
      %p97 = por %p95, %p96
      %p98 = scmp.ne.s32.totalorder %s89, %s90
      %p99 = scmp.eq.s32.totalorder %s23, 0
      %p100 = por %p98, %p99
      %p101 = scmp.ne.s32.totalorder %s89, %s90
      %p102 = scmp.eq.s32.totalorder %s24, 1
      %p103 = por %p101, %p102
      %p105 = scmp.ne.s32.totalorder %s90, %s104
      %p106 = scmp.eq.s32.totalorder %s24, 0
      %p107 = por %p105, %p106
      %s109 = sadd.s32 %s108, 1
      %p112 = scmp.eq.s32.totalorder %s18, 1
      %p113 = scmp.ne.s32.totalorder %s108, %s110
      %p114 = scmp.eq.s32.totalorder %s18, 0
      %p115 = por %p113, %p114
      %p116 = scmp.ne.s32.totalorder %s108, %s110
      %p117 = scmp.eq.s32.totalorder %s23, 1
      %p118 = por %p116, %p117
      %p119 = scmp.ne.s32.totalorder %s110, %s111
      %p120 = scmp.eq.s32.totalorder %s23, 0
      %p121 = por %p119, %p120
      %p122 = scmp.ne.s32.totalorder %s110, %s111
      %p123 = scmp.eq.s32.totalorder %s24, 1
      %p124 = por %p122, %p123
      %p126 = scmp.ne.s32.totalorder %s111, %s125
      %p127 = scmp.eq.s32.totalorder %s24, 0
      %p128 = por %p126, %p127
      %s130 = sadd.s32 %s129, 1
      %p133 = scmp.eq.s32.totalorder %s18, 1
      %p134 = scmp.ne.s32.totalorder %s129, %s131
      %p135 = scmp.eq.s32.totalorder %s18, 0
      %p136 = por %p134, %p135
      %p137 = scmp.ne.s32.totalorder %s129, %s131
      %p138 = scmp.eq.s32.totalorder %s23, 1
      %p139 = por %p137, %p138
      %p140 = scmp.ne.s32.totalorder %s131, %s132
      %p141 = scmp.eq.s32.totalorder %s23, 0
      %p142 = por %p140, %p141
      %p143 = scmp.ne.s32.totalorder %s131, %s132
      %p144 = scmp.eq.s32.totalorder %s24, 1
      %p145 = por %p143, %p144
      %p147 = scmp.ne.s32.totalorder %s132, %s146
      %p148 = scmp.eq.s32.totalorder %s24, 0
      %p149 = por %p147, %p148
      %s150 = ssub.s32 %s25, %s37
      %s151 = ssub.s32 %s26, %s33
      %s152 = sor.u32 %s150, %s151
      %p153 = scmp.eq.s32.totalorder %s152, 0
      %s155 = sadd.s32 %s154, 1
      %s156 = scalar_select %p153, %s154, %s155
      %p159 = pneg %p153
      %p160 = scmp.eq.s32.totalorder %s18, 1
      %p161 = por %p159, %p160
      %p162 = scmp.ne.s32.totalorder %s154, %s157
      %p163 = scmp.eq.s32.totalorder %s18, 0
      %p164 = por %p162, %p163
      %p165 = scmp.ne.s32.totalorder %s154, %s157
      %p166 = scmp.eq.s32.totalorder %s23, 1
      %p167 = por %p165, %p166
      %p168 = scmp.ne.s32.totalorder %s157, %s158
      %p169 = scmp.eq.s32.totalorder %s23, 0
      %p170 = por %p168, %p169
      %p171 = scmp.ne.s32.totalorder %s157, %s158
      %p172 = scmp.eq.s32.totalorder %s24, 1
      %p173 = por %p171, %p172
      %p175 = scmp.ne.s32.totalorder %s158, %s174
      %p176 = scmp.eq.s32.totalorder %s24, 0
      %p177 = por %p175, %p176
      %p178 = scmp.le.s32.totalorder 1, %s18
      %p179 = scmp.lt.s32.totalorder %s18, 3
      %p180 = pnand %p178, %p179
      %p181 = pneg %p180
      // Predicated region
      $region9: #{tpu_custom_call.1} parent=5 // pred_check
        _
      $region10: #{tpu_custom_call.1} parent=5 // pred_check_branch
        %183 = sbr.rel (%p180) target = $region12
      $region11: #{tpu_custom_call.1} parent=5 // pred_region
        %s184 = ssub.s32 %s18, 1
        // Predicated region
        $region13: #{tpu_custom_call.1} parent=11 // pred_check
          %p185 = pneg %p79
        $region14: #{tpu_custom_call.1} parent=11 // pred_check_branch
          %187 = sbr.rel (%p185) target = $region16
        $region15: #{tpu_custom_call.1} parent=11 // pred_region
          _
        $region16: #{tpu_custom_call.1} parent=11 // pred_fallthru
          _
        // Predicated region
        $region17: #{tpu_custom_call.1} parent=11 // pred_check
          %p188 = pneg %p100
        $region18: #{tpu_custom_call.1} parent=11 // pred_check_branch
          %190 = sbr.rel (%p188) target = $region20
        $region19: #{tpu_custom_call.1} parent=11 // pred_region
          _
        $region20: #{tpu_custom_call.1} parent=11 // pred_fallthru
          _
        // Predicated region
        $region21: #{tpu_custom_call.1} parent=11 // pred_check
          %p191 = pneg %p121
        $region22: #{tpu_custom_call.1} parent=11 // pred_check_branch
          %193 = sbr.rel (%p191) target = $region24
        $region23: #{tpu_custom_call.1} parent=11 // pred_region
          %s195 = ssub.s32 3072, 3072
          %196 = vsyncadd [#allocation6], %s195
          %s197 = sshll.u32 [#allocation5], 4
          %s198 = int_to_ptr.vmem [resolvable:$true] %s197
          %203 = dma.hbm_to_vmem [thread:$0]  %s3, 3072, %s198, [#allocation6], 192, 192, 12
        $region24: #{tpu_custom_call.1} parent=11 // pred_fallthru
          _
        // Predicated region
        $region25: #{tpu_custom_call.1} parent=11 // pred_check
          %p204 = pneg %p142
        $region26: #{tpu_custom_call.1} parent=11 // pred_check_branch
          %206 = sbr.rel (%p204) target = $region28
        $region27: #{tpu_custom_call.1} parent=11 // pred_region
          _
        $region28: #{tpu_custom_call.1} parent=11 // pred_fallthru
          _
      $region12: #{tpu_custom_call.1} parent=5 // pred_fallthru
        _
      %p207 = scmp.lt.s32.totalorder %s18, 2
      // Predicated region
      $region29: #{tpu_custom_call.1} parent=5 // pred_check
        %p208 = pneg %p207
      $region30: #{tpu_custom_call.1} parent=5 // pred_check_branch
        %210 = sbr.rel (%p208) target = $region32
      $region31: #{tpu_custom_call.1} parent=5 // pred_region
        // Predicated region
        $region33: #{tpu_custom_call.1} parent=31 // pred_check
          %p211 = pneg %p52
        $region34: #{tpu_custom_call.1} parent=31 // pred_check_branch
          %213 = sbr.rel (%p211) target = $region36
        $region35: #{tpu_custom_call.1} parent=31 // pred_region
          %s214 = sand.u32 %s42, 1
          %s215 = scalar_lea.sflag [#allocation3], %s214
          %s216 = sand.u32 %s42, 1
          %s217 = smul.addr %s216, 128
          %s218 = scalar_lea.vmem [#allocation2], %s217
          %s219 = smul.u32 16, %s26
          %s221 = ssub.s32 2048, 2048
          %222 = vsyncadd %s215, %s221
          %s223 = smul.addr %s25, 16
          %s224 = sadd.s32 %s219, %s223
          %s225 = smul.addr %s224, 128
          %s226 = scalar_lea.hbm %s0, %s225
          %s227 = sshll.u32 %s218, 4
          %s228 = int_to_ptr.vmem [resolvable:$true] %s227
          %233 = dma.hbm_to_vmem [thread:$0]  %s226, 2048, %s228, %s215, 128, 128, 8
        $region36: #{tpu_custom_call.1} parent=31 // pred_fallthru
          _
      $region32: #{tpu_custom_call.1} parent=5 // pred_fallthru
        _
      %p234 = scmp.le.s32.totalorder 1, %s18
      %p235 = scmp.lt.s32.totalorder %s18, 3
      %p236 = pnand %p234, %p235
      %p237 = pneg %p236
      // Predicated region
      $region37: #{tpu_custom_call.1} parent=5 // pred_check
        _
      $region38: #{tpu_custom_call.1} parent=5 // pred_check_branch
        %239 = sbr.rel (%p236) target = $region40
      $region39: #{tpu_custom_call.1} parent=5 // pred_region
        %s240 = ssub.s32 %s18, 1
        %s241 = sand.u32 %s45, 1
        %s242 = scalar_lea.sflag [#allocation3], %s241
        %s243 = sand.u32 %s45, 1
        %s244 = smul.addr %s243, 128
        %s245 = scalar_lea.vmem [#allocation2], %s244
        // Predicated region
        $region41: #{tpu_custom_call.1} parent=39 // pred_check
          %p246 = pneg %p58
        $region42: #{tpu_custom_call.1} parent=39 // pred_check_branch
          %248 = sbr.rel (%p246) target = $region44
        $region43: #{tpu_custom_call.1} parent=39 // pred_region
          %249 = dma.done %s242, 2048
        $region44: #{tpu_custom_call.1} parent=39 // pred_fallthru
          _
        // Predicated region
        $region45: #{tpu_custom_call.1} parent=39 // pred_check
          %p250 = pneg %p121
        $region46: #{tpu_custom_call.1} parent=39 // pred_check_branch
          %252 = sbr.rel (%p250) target = $region48
        $region47: #{tpu_custom_call.1} parent=39 // pred_region
          %253 = dma.done [#allocation6], 3072
        $region48: #{tpu_custom_call.1} parent=39 // pred_fallthru
          _
        %s254 = sand.u32 %s45, 1
        %s255 = scalar_lea.sflag [#allocation3], %s254
        %s256 = sand.u32 %s45, 1
        %s257 = smul.addr %s256, 128
        %s258 = scalar_lea.vmem [#allocation2], %s257
        %p259 = pneg %p58
        %p260 = pneg %p55
        %p261 = pneg %p79
        %p262 = pneg %p76
        %p263 = pneg %p100
        %p264 = pneg %p97
        %p265 = pneg %p121
        %p266 = pneg %p118
        %p267 = pneg %p142
        %p268 = pneg %p139
        %p269 = pneg %p170
        %p270 = pneg %p167
        %s271 = sand.u32 %s157, 1
        %s272 = scalar_lea.sflag [#allocation4], %s271
        %s273 = sand.u32 %s157, 1
        %s274 = smul.addr %s273, 192
        %s275 = scalar_lea.vmem [#allocation7], %s274
        %s276 = smul.u32 16, %s28
        %s277 = smul.u32 16, %s28
        %v279 = vld [vmem:[%s245] sm:$0xff]
        %v280 = vld [vmem:[%s245 + $0x8] sm:$0xff]
        %v281 = vld [vmem:[%s245 + $0x10] sm:$0xff]
        %v282 = vld [vmem:[%s245 + $0x18] sm:$0xff]
        %v283 = vld [vmem:[%s245 + $0x20] sm:$0xff]
        %v284 = vld [vmem:[%s245 + $0x28] sm:$0xff]
        %v285 = vld [vmem:[%s245 + $0x30] sm:$0xff]
        %v286 = vld [vmem:[%s245 + $0x38] sm:$0xff]
        %v287 = vld [vmem:[%s245 + $0x40] sm:$0xff]
        %v288 = vld [vmem:[%s245 + $0x48] sm:$0xff]
        %v289 = vld [vmem:[%s245 + $0x50] sm:$0xff]
        %v290 = vld [vmem:[%s245 + $0x58] sm:$0xff]
        %v291 = vld [vmem:[%s245 + $0x60] sm:$0xff]
        %v292 = vld [vmem:[%s245 + $0x68] sm:$0xff]
        %v293 = vld [vmem:[%s245 + $0x70] sm:$0xff]
        %v294 = vld [vmem:[%s245 + $0x78] sm:$0xff]
        %v295 = vld [vmem:[%s1] sm:$0x1]
        %v296 = vld [vmem:[%s2] sm:$0x1]
        %297 = vadd.xlane.f32.xlu0 %v279
        %v298 = vpop.xlane.xlu0 %297
        %299 = vadd.xlane.f32.xlu0 %v280
        %v300 = vpop.xlane.xlu0 %299
        %301 = vadd.xlane.f32.xlu0 %v281
        %v302 = vpop.xlane.xlu0 %301
        %303 = vadd.xlane.f32.xlu0 %v282
        %v304 = vpop.xlane.xlu0 %303
        %305 = vadd.xlane.f32.xlu0 %v283
        %v306 = vpop.xlane.xlu0 %305
        %307 = vadd.xlane.f32.xlu0 %v284
        %v308 = vpop.xlane.xlu0 %307
        %309 = vadd.xlane.f32.xlu0 %v285
        %v310 = vpop.xlane.xlu0 %309
        %311 = vadd.xlane.f32.xlu0 %v286
        %v312 = vpop.xlane.xlu0 %311
        %313 = vadd.xlane.f32.xlu0 %v287
        %v314 = vpop.xlane.xlu0 %313
        %315 = vadd.xlane.f32.xlu0 %v288
        %v316 = vpop.xlane.xlu0 %315
        %317 = vadd.xlane.f32.xlu0 %v289
        %v318 = vpop.xlane.xlu0 %317
        %319 = vadd.xlane.f32.xlu0 %v290
        %v320 = vpop.xlane.xlu0 %319
        %321 = vadd.xlane.f32.xlu0 %v291
        %v322 = vpop.xlane.xlu0 %321
        %323 = vadd.xlane.f32.xlu0 %v292
        %v324 = vpop.xlane.xlu0 %323
        %325 = vadd.xlane.f32.xlu0 %v293
        %v326 = vpop.xlane.xlu0 %325
        %327 = vadd.xlane.f32.xlu0 %v294
        %v328 = vpop.xlane.xlu0 %327
        %v329 = vrcp.pop 128.0
        %v330 = vmul.f32 %v298, %v329
        %v331 = vmul.f32 %v300, %v329
        %v332 = vmul.f32 %v302, %v329
        %v333 = vmul.f32 %v304, %v329
        %v334 = vmul.f32 %v306, %v329
        %v335 = vmul.f32 %v308, %v329
        %v336 = vmul.f32 %v310, %v329
        %v337 = vmul.f32 %v312, %v329
        %v338 = vmul.f32 %v314, %v329
        %v339 = vmul.f32 %v316, %v329
        %v340 = vmul.f32 %v318, %v329
        %v341 = vmul.f32 %v320, %v329
        %v342 = vmul.f32 %v322, %v329
        %v343 = vmul.f32 %v324, %v329
        %v344 = vmul.f32 %v326, %v329
        %v345 = vmul.f32 %v328, %v329
        %v346 = vsub.f32 %v279, %v330
        %v347 = vsub.f32 %v280, %v331
        %v348 = vsub.f32 %v281, %v332
        %v349 = vsub.f32 %v282, %v333
        %v350 = vsub.f32 %v283, %v334
        %v351 = vsub.f32 %v284, %v335
        %v352 = vsub.f32 %v285, %v336
        %v353 = vsub.f32 %v286, %v337
        %v354 = vsub.f32 %v287, %v338
        %v355 = vsub.f32 %v288, %v339
        %v356 = vsub.f32 %v289, %v340
        %v357 = vsub.f32 %v290, %v341
        %v358 = vsub.f32 %v291, %v342
        %v359 = vsub.f32 %v292, %v343
        %v360 = vsub.f32 %v293, %v344
        %v361 = vsub.f32 %v294, %v345
        %v362 = vmul.f32 %v346, %v346
        %v363 = vmul.f32 %v347, %v347
        %v364 = vmul.f32 %v348, %v348
        %v365 = vmul.f32 %v349, %v349
        %v366 = vmul.f32 %v350, %v350
        %v367 = vmul.f32 %v351, %v351
        %v368 = vmul.f32 %v352, %v352
        %v369 = vmul.f32 %v353, %v353
        %v370 = vmul.f32 %v354, %v354
        %v371 = vmul.f32 %v355, %v355
        %v372 = vmul.f32 %v356, %v356
        %v373 = vmul.f32 %v357, %v357
        %v374 = vmul.f32 %v358, %v358
        %v375 = vmul.f32 %v359, %v359
        %v376 = vmul.f32 %v360, %v360
        %v377 = vmul.f32 %v361, %v361
        %378 = vadd.xlane.f32.xlu0 %v362
        %v379 = vpop.xlane.xlu0 %378
        %380 = vadd.xlane.f32.xlu0 %v363
        %v381 = vpop.xlane.xlu0 %380
        %382 = vadd.xlane.f32.xlu0 %v364
        %v383 = vpop.xlane.xlu0 %382
        %384 = vadd.xlane.f32.xlu0 %v365
        %v385 = vpop.xlane.xlu0 %384
        %386 = vadd.xlane.f32.xlu0 %v366
        %v387 = vpop.xlane.xlu0 %386
        %388 = vadd.xlane.f32.xlu0 %v367
        %v389 = vpop.xlane.xlu0 %388
        %390 = vadd.xlane.f32.xlu0 %v368
        %v391 = vpop.xlane.xlu0 %390
        %392 = vadd.xlane.f32.xlu0 %v369
        %v393 = vpop.xlane.xlu0 %392
        %394 = vadd.xlane.f32.xlu0 %v370
        %v395 = vpop.xlane.xlu0 %394
        %396 = vadd.xlane.f32.xlu0 %v371
        %v397 = vpop.xlane.xlu0 %396
        %398 = vadd.xlane.f32.xlu0 %v372
        %v399 = vpop.xlane.xlu0 %398
        %400 = vadd.xlane.f32.xlu0 %v373
        %v401 = vpop.xlane.xlu0 %400
        %402 = vadd.xlane.f32.xlu0 %v374
        %v403 = vpop.xlane.xlu0 %402
        %404 = vadd.xlane.f32.xlu0 %v375
        %v405 = vpop.xlane.xlu0 %404
        %406 = vadd.xlane.f32.xlu0 %v376
        %v407 = vpop.xlane.xlu0 %406
        %408 = vadd.xlane.f32.xlu0 %v377
        %v409 = vpop.xlane.xlu0 %408
        %v410 = vmul.f32 %v379, %v329
        %v411 = vmul.f32 %v381, %v329
        %v412 = vmul.f32 %v383, %v329
        %v413 = vmul.f32 %v385, %v329
        %v414 = vmul.f32 %v387, %v329
        %v415 = vmul.f32 %v389, %v329
        %v416 = vmul.f32 %v391, %v329
        %v417 = vmul.f32 %v393, %v329
        %v418 = vmul.f32 %v395, %v329
        %v419 = vmul.f32 %v397, %v329
        %v420 = vmul.f32 %v399, %v329
        %v421 = vmul.f32 %v401, %v329
        %v422 = vmul.f32 %v403, %v329
        %v423 = vmul.f32 %v405, %v329
        %v424 = vmul.f32 %v407, %v329
        %v425 = vmul.f32 %v409, %v329
        %v426 = vadd.f32 %v410, 1e-05
        %v427 = vadd.f32 %v411, 1e-05
        %v428 = vadd.f32 %v412, 1e-05
        %v429 = vadd.f32 %v413, 1e-05
        %v430 = vadd.f32 %v414, 1e-05
        %v431 = vadd.f32 %v415, 1e-05
        %v432 = vadd.f32 %v416, 1e-05
        %v433 = vadd.f32 %v417, 1e-05
        %v434 = vadd.f32 %v418, 1e-05
        %v435 = vadd.f32 %v419, 1e-05
        %v436 = vadd.f32 %v420, 1e-05
        %v437 = vadd.f32 %v421, 1e-05
        %v438 = vadd.f32 %v422, 1e-05
        %v439 = vadd.f32 %v423, 1e-05
        %v440 = vadd.f32 %v424, 1e-05
        %v441 = vadd.f32 %v425, 1e-05
        %v442 = vrsqrt.pop %v426
        %v443 = vrsqrt.pop %v427
        %v444 = vrsqrt.pop %v428
        %v445 = vrsqrt.pop %v429
        %v446 = vrsqrt.pop %v430
        %v447 = vrsqrt.pop %v431
        %v448 = vrsqrt.pop %v432
        %v449 = vrsqrt.pop %v433
        %v450 = vrsqrt.pop %v434
        %v451 = vrsqrt.pop %v435
        %v452 = vrsqrt.pop %v436
        %v453 = vrsqrt.pop %v437
        %v454 = vrsqrt.pop %v438
        %v455 = vrsqrt.pop %v439
        %v456 = vrsqrt.pop %v440
        %v457 = vrsqrt.pop %v441
        %v458 = vmul.f32 %v346, %v442
        %v459 = vmul.f32 %v347, %v443
        %v460 = vmul.f32 %v348, %v444
        %v461 = vmul.f32 %v349, %v445
        %v462 = vmul.f32 %v350, %v446
        %v463 = vmul.f32 %v351, %v447
        %v464 = vmul.f32 %v352, %v448
        %v465 = vmul.f32 %v353, %v449
        %v466 = vmul.f32 %v354, %v450
        %v467 = vmul.f32 %v355, %v451
        %v468 = vmul.f32 %v356, %v452
        %v469 = vmul.f32 %v357, %v453
        %v470 = vmul.f32 %v358, %v454
        %v471 = vmul.f32 %v359, %v455
        %v472 = vmul.f32 %v360, %v456
        %v473 = vmul.f32 %v361, %v457
        %v475 = vlaneseq
        %v476 = vshrl.u32 %v475, 7
        %v477 = vsub.s32 0, %v476
        %v478 = vrot.slane %v295, %v477
        %v480 = vmul.f32 %v458, %v478
        %v481 = vmul.f32 %v459, %v478
        %v482 = vmul.f32 %v460, %v478
        %v483 = vmul.f32 %v461, %v478
        %v484 = vmul.f32 %v462, %v478
        %v485 = vmul.f32 %v463, %v478
        %v486 = vmul.f32 %v464, %v478
        %v487 = vmul.f32 %v465, %v478
        %v488 = vmul.f32 %v466, %v478
        %v489 = vmul.f32 %v467, %v478
        %v490 = vmul.f32 %v468, %v478
        %v491 = vmul.f32 %v469, %v478
        %v492 = vmul.f32 %v470, %v478
        %v493 = vmul.f32 %v471, %v478
        %v494 = vmul.f32 %v472, %v478
        %v495 = vmul.f32 %v473, %v478
        %v497 = vlaneseq
        %v498 = vshrl.u32 %v497, 7
        %v499 = vsub.s32 0, %v498
        %v500 = vrot.slane %v296, %v499
        %v502 = vadd.f32 %v480, %v500
        %v503 = vadd.f32 %v481, %v500
        %v504 = vadd.f32 %v482, %v500
        %v505 = vadd.f32 %v483, %v500
        %v506 = vadd.f32 %v484, %v500
        %v507 = vadd.f32 %v485, %v500
        %v508 = vadd.f32 %v486, %v500
        %v509 = vadd.f32 %v487, %v500
        %v510 = vadd.f32 %v488, %v500
        %v511 = vadd.f32 %v489, %v500
        %v512 = vadd.f32 %v490, %v500
        %v513 = vadd.f32 %v491, %v500
        %v514 = vadd.f32 %v492, %v500
        %v515 = vadd.f32 %v493, %v500
        %v516 = vadd.f32 %v494, %v500
        %v517 = vadd.f32 %v495, %v500
        %v518 = vpack.c.bf16 %v503, %v502
        %v519 = vpack.c.bf16 %v505, %v504
        %v520 = vpack.c.bf16 %v507, %v506
        %v521 = vpack.c.bf16 %v509, %v508
        %v522 = vpack.c.bf16 %v511, %v510
        %v523 = vpack.c.bf16 %v513, %v512
        %v524 = vpack.c.bf16 %v515, %v514
        %v525 = vpack.c.bf16 %v517, %v516
        %v526 = vld [vmem:[#allocation5] sm:$0xff]
        %v527 = vld [vmem:[#allocation5 + $0x8] sm:$0xf]
        %v528 = vld [vmem:[#allocation5 + $0xc] sm:$0xff]
        %v529 = vld [vmem:[#allocation5 + $0x14] sm:$0xf]
        %v530 = vld [vmem:[#allocation5 + $0x18] sm:$0xff]
        %v531 = vld [vmem:[#allocation5 + $0x20] sm:$0xf]
        %v532 = vld [vmem:[#allocation5 + $0x24] sm:$0xff]
        %v533 = vld [vmem:[#allocation5 + $0x2c] sm:$0xf]
        %v534 = vld [vmem:[#allocation5 + $0x30] sm:$0xff]
        %v535 = vld [vmem:[#allocation5 + $0x38] sm:$0xf]
        %v536 = vld [vmem:[#allocation5 + $0x3c] sm:$0xff]
        %v537 = vld [vmem:[#allocation5 + $0x44] sm:$0xf]
        %v538 = vld [vmem:[#allocation5 + $0x48] sm:$0xff]
        %v539 = vld [vmem:[#allocation5 + $0x50] sm:$0xf]
        %v540 = vld [vmem:[#allocation5 + $0x54] sm:$0xff]
        %v541 = vld [vmem:[#allocation5 + $0x5c] sm:$0xf]
        %v542 = vld [vmem:[#allocation5 + $0x60] sm:$0xff]
        %v543 = vld [vmem:[#allocation5 + $0x68] sm:$0xf]
        %v544 = vld [vmem:[#allocation5 + $0x6c] sm:$0xff]
        %v545 = vld [vmem:[#allocation5 + $0x74] sm:$0xf]
        %v546 = vld [vmem:[#allocation5 + $0x78] sm:$0xff]
        %v547 = vld [vmem:[#allocation5 + $0x80] sm:$0xf]
        %v548 = vld [vmem:[#allocation5 + $0x84] sm:$0xff]
        %v549 = vld [vmem:[#allocation5 + $0x8c] sm:$0xf]
        %v550 = vld [vmem:[#allocation5 + $0x90] sm:$0xff]
        %v551 = vld [vmem:[#allocation5 + $0x98] sm:$0xf]
        %v552 = vld [vmem:[#allocation5 + $0x9c] sm:$0xff]
        %v553 = vld [vmem:[#allocation5 + $0xa4] sm:$0xf]
        %v554 = vld [vmem:[#allocation5 + $0xa8] sm:$0xff]
        %v555 = vld [vmem:[#allocation5 + $0xb0] sm:$0xf]
        %v556 = vld [vmem:[#allocation5 + $0xb4] sm:$0xff]
        %v557 = vld [vmem:[#allocation5 + $0xbc] sm:$0xf]
        %v558 = vld [vmem:[%s4] sm:$0x7]
        %v560 = vlaneseq
        %v561 = vshrl.u32 %v560, 7
        %v562 = vsub.s32 0, %v561
        %v563 = vrot.slane %v558, %v562
        %v564 = vlaneseq
        %v565 = vshrl.u32 %v564, 7
        %v566 = vsub.s32 1, %v565
        %v567 = vrot.slane %v558, %v566
        %v568 = vlaneseq
        %v569 = vshrl.u32 %v568, 7
        %v570 = vsub.s32 2, %v569
        %v571 = vrot.slane %v558, %v570
        %v607 = vunpack.c.l.b16 %v526
        %v608 = vunpack.c.h.b16 %v526
        %v609 = vunpack.c.l.b16 %v527
        %v610 = vunpack.c.l.b16 %v528
        %v611 = vunpack.c.h.b16 %v528
        %v612 = vunpack.c.l.b16 %v529
        %v613 = vunpack.c.l.b16 %v530
        %v614 = vunpack.c.h.b16 %v530
        %v615 = vunpack.c.l.b16 %v531
        %v616 = vunpack.c.l.b16 %v532
        %v617 = vunpack.c.h.b16 %v532
        %v618 = vunpack.c.l.b16 %v533
        %v619 = vunpack.c.l.b16 %v534
        %v620 = vunpack.c.h.b16 %v534
        %v621 = vunpack.c.l.b16 %v535
        %v622 = vunpack.c.l.b16 %v536
        %v623 = vunpack.c.h.b16 %v536
        %v624 = vunpack.c.l.b16 %v537
        %v625 = vunpack.c.l.b16 %v538
        %v626 = vunpack.c.h.b16 %v538
        %v627 = vunpack.c.l.b16 %v539
        %v628 = vunpack.c.l.b16 %v540
        %v629 = vunpack.c.h.b16 %v540
        %v630 = vunpack.c.l.b16 %v541
        %v631 = vunpack.c.l.b16 %v542
        %v632 = vunpack.c.h.b16 %v542
        %v633 = vunpack.c.l.b16 %v543
        %v634 = vunpack.c.l.b16 %v544
        %v635 = vunpack.c.h.b16 %v544
        %v636 = vunpack.c.l.b16 %v545
        %v637 = vunpack.c.l.b16 %v546
        %v638 = vunpack.c.h.b16 %v546
        %v639 = vunpack.c.l.b16 %v547
        %v640 = vunpack.c.l.b16 %v548
        %v641 = vunpack.c.h.b16 %v548
        %v642 = vunpack.c.l.b16 %v549
        %v643 = vunpack.c.l.b16 %v550
        %v644 = vunpack.c.h.b16 %v550
        %v645 = vunpack.c.l.b16 %v551
        %v646 = vunpack.c.l.b16 %v552
        %v647 = vunpack.c.h.b16 %v552
        %v648 = vunpack.c.l.b16 %v553
        %v649 = vunpack.c.l.b16 %v554
        %v650 = vunpack.c.h.b16 %v554
        %v651 = vunpack.c.l.b16 %v555
        %v652 = vunpack.c.l.b16 %v556
        %v653 = vunpack.c.h.b16 %v556
        %v654 = vunpack.c.l.b16 %v557
        %v655 = vpack.c.b16 %v610, %v607
        %v656 = vpack.c.b16 %v611, %v608
        %v657 = vpack.c.b16 %v612, %v609
        %v658 = vpack.c.b16 %v616, %v613
        %v659 = vpack.c.b16 %v617, %v614
        %v660 = vpack.c.b16 %v618, %v615
        %v661 = vpack.c.b16 %v622, %v619
        %v662 = vpack.c.b16 %v623, %v620
        %v663 = vpack.c.b16 %v624, %v621
        %v664 = vpack.c.b16 %v628, %v625
        %v665 = vpack.c.b16 %v629, %v626
        %v666 = vpack.c.b16 %v630, %v627
        %v667 = vpack.c.b16 %v634, %v631
        %v668 = vpack.c.b16 %v635, %v632
        %v669 = vpack.c.b16 %v636, %v633
        %v670 = vpack.c.b16 %v640, %v637
        %v671 = vpack.c.b16 %v641, %v638
        %v672 = vpack.c.b16 %v642, %v639
        %v673 = vpack.c.b16 %v646, %v643
        %v674 = vpack.c.b16 %v647, %v644
        %v675 = vpack.c.b16 %v648, %v645
        %v676 = vpack.c.b16 %v652, %v649
        %v677 = vpack.c.b16 %v653, %v650
        %v678 = vpack.c.b16 %v654, %v651
        %703 = vmatprep.subr.bf16.mxu0 %v677
        %704 = vmatpush1.bf16.msra.mxu0 %v676
        %705 = vmatprep.subr.bf16.mxu0 %v674
        %706 = vmatpush1.bf16.msra.mxu0 %v673
        %707 = vmatprep.subr.bf16.mxu0 %v671
        %708 = vmatpush1.bf16.msra.mxu0 %v670
        %709 = vmatprep.subr.bf16.mxu0 %v668
        %710 = vmatpush1.bf16.msra.mxu0 %v667
        %711 = vmatprep.subr.bf16.mxu0 %v665
        %712 = vmatpush1.bf16.msra.mxu0 %v664
        %713 = vmatprep.subr.bf16.mxu0 %v662
        %714 = vmatpush1.bf16.msra.mxu0 %v661
        %715 = vmatprep.subr.bf16.mxu0 %v659
        %716 = vmatpush1.bf16.msra.mxu0 %v658
        %717 = vmatprep.subr.bf16.mxu0 %v656
        %718 = vmatpush1.bf16.msra.mxu0 %v655
        %719 = vmatprep.subr.bf16.mxu0 0
        %720 = vmatpush2.bf16.msra.mxu0 0
        %721 = vmatprep.subr.bf16.mxu0 0
        %722 = vmatpush2.bf16.msra.mxu0 0
        %723 = vmatprep.subr.bf16.mxu0 0
        %724 = vmatpush2.bf16.msra.mxu0 0
        %725 = vmatprep.subr.bf16.mxu0 0
        %726 = vmatpush2.bf16.msra.mxu0 0
        %727 = vmatprep.subr.bf16.mxu0 0
        %728 = vmatpush2.bf16.msra.mxu0 0
        %729 = vmatprep.subr.bf16.mxu0 0
        %730 = vmatpush2.bf16.msra.mxu0 0
        %731 = vmatprep.subr.bf16.mxu0 0
        %732 = vmatpush2.bf16.msra.mxu0 0
        %733 = vmatprep.subr.bf16.mxu0 0
        %734 = vmatpush2.bf16.msra.mxu0 0
        %735 = vmatprep.mubr.bf16.mxu0 0
        %736 = vmatmul.mubr.bf16.gmra.mxu0 %v518
        %v737 = vpop.f32.mrf.mxu0
        %v738 = vadd.f32 %v563, %v737
        %v739 = vpop.f32.mrf.mxu0
        %v740 = vadd.f32 %v567, %v739
        %v741 = vpop.f32.mrf.mxu0
        %v742 = vadd.f32 %v563, %v741
        %v743 = vpop.f32.mrf.mxu0
        %v744 = vadd.f32 %v567, %v743
        %745 = vmatprep.mubr.bf16.mxu0 0
        %746 = vmatmul.mubr.bf16.gmra.mxu0 %v519
        %v747 = vpop.f32.mrf.mxu0
        %v748 = vadd.f32 %v563, %v747
        %v749 = vpop.f32.mrf.mxu0
        %v750 = vadd.f32 %v567, %v749
        %v751 = vpop.f32.mrf.mxu0
        %v752 = vadd.f32 %v563, %v751
        %v753 = vpop.f32.mrf.mxu0
        %v754 = vadd.f32 %v567, %v753
        %755 = vmatprep.mubr.bf16.mxu0 0
        %756 = vmatmul.mubr.bf16.gmra.mxu0 %v520
        %v757 = vpop.f32.mrf.mxu0
        %v758 = vadd.f32 %v563, %v757
        %v759 = vpop.f32.mrf.mxu0
        %v760 = vadd.f32 %v567, %v759
        %v761 = vpop.f32.mrf.mxu0
        %v762 = vadd.f32 %v563, %v761
        %v763 = vpop.f32.mrf.mxu0
        %v764 = vadd.f32 %v567, %v763
        %765 = vmatprep.mubr.bf16.mxu0 0
        %766 = vmatmul.mubr.bf16.gmra.mxu0 %v521
        %v767 = vpop.f32.mrf.mxu0
        %v768 = vadd.f32 %v563, %v767
        %v769 = vpop.f32.mrf.mxu0
        %v770 = vadd.f32 %v567, %v769
        %v771 = vpop.f32.mrf.mxu0
        %v772 = vadd.f32 %v563, %v771
        %v773 = vpop.f32.mrf.mxu0
        %v774 = vadd.f32 %v567, %v773
        %775 = vmatprep.mubr.bf16.mxu0 0
        %776 = vmatmul.mubr.bf16.gmra.mxu0 %v522
        %v777 = vpop.f32.mrf.mxu0
        %v778 = vadd.f32 %v563, %v777
        %v779 = vpop.f32.mrf.mxu0
        %v780 = vadd.f32 %v567, %v779
        %v781 = vpop.f32.mrf.mxu0
        %v782 = vadd.f32 %v563, %v781
        %v783 = vpop.f32.mrf.mxu0
        %v784 = vadd.f32 %v567, %v783
        %785 = vmatprep.mubr.bf16.mxu0 0
        %786 = vmatmul.mubr.bf16.gmra.mxu0 %v523
        %v787 = vpop.f32.mrf.mxu0
        %v788 = vadd.f32 %v563, %v787
        %v789 = vpop.f32.mrf.mxu0
        %v790 = vadd.f32 %v567, %v789
        %v791 = vpop.f32.mrf.mxu0
        %v792 = vadd.f32 %v563, %v791
        %v793 = vpop.f32.mrf.mxu0
        %v794 = vadd.f32 %v567, %v793
        %795 = vmatprep.mubr.bf16.mxu0 0
        %796 = vmatmul.mubr.bf16.gmra.mxu0 %v524
        %v797 = vpop.f32.mrf.mxu0
        %v798 = vadd.f32 %v563, %v797
        %v799 = vpop.f32.mrf.mxu0
        %v800 = vadd.f32 %v567, %v799
        %v801 = vpop.f32.mrf.mxu0
        %v802 = vadd.f32 %v563, %v801
        %v803 = vpop.f32.mrf.mxu0
        %v804 = vadd.f32 %v567, %v803
        %805 = vmatprep.mubr.bf16.mxu0 0
        %806 = vmatmul.mubr.bf16.gmra.mxu0 %v525
        %v807 = vpop.f32.mrf.mxu0
        %v808 = vadd.f32 %v563, %v807
        %v809 = vpop.f32.mrf.mxu0
        %v810 = vadd.f32 %v567, %v809
        %v811 = vpop.f32.mrf.mxu0
        %v812 = vadd.f32 %v563, %v811
        %v813 = vpop.f32.mrf.mxu0
        %v814 = vadd.f32 %v567, %v813
        %815 = vdwg.mxu0
        %816 = vmatprep.subr.bf16.mxu0 0
        %817 = vmatpush1.bf16.msra.mxu0 %v678
        %818 = vmatprep.subr.bf16.mxu0 0
        %819 = vmatpush1.bf16.msra.mxu0 %v675
        %820 = vmatprep.subr.bf16.mxu0 0
        %821 = vmatpush1.bf16.msra.mxu0 %v672
        %822 = vmatprep.subr.bf16.mxu0 0
        %823 = vmatpush1.bf16.msra.mxu0 %v669
        %824 = vmatprep.subr.bf16.mxu0 0
        %825 = vmatpush1.bf16.msra.mxu0 %v666
        %826 = vmatprep.subr.bf16.mxu0 0
        %827 = vmatpush1.bf16.msra.mxu0 %v663
        %828 = vmatprep.subr.bf16.mxu0 0
        %829 = vmatpush1.bf16.msra.mxu0 %v660
        %830 = vmatprep.subr.bf16.mxu0 0
        %831 = vmatpush1.bf16.msra.mxu0 %v657
        %832 = vmatprep.subr.bf16.mxu0 0
        %833 = vmatpush2.bf16.msra.mxu0 0
        %834 = vmatprep.subr.bf16.mxu0 0
        %835 = vmatpush2.bf16.msra.mxu0 0
        %836 = vmatprep.subr.bf16.mxu0 0
        %837 = vmatpush2.bf16.msra.mxu0 0
        %838 = vmatprep.subr.bf16.mxu0 0
        %839 = vmatpush2.bf16.msra.mxu0 0
        %840 = vmatprep.subr.bf16.mxu0 0
        %841 = vmatpush2.bf16.msra.mxu0 0
        %842 = vmatprep.subr.bf16.mxu0 0
        %843 = vmatpush2.bf16.msra.mxu0 0
        %844 = vmatprep.subr.bf16.mxu0 0
        %845 = vmatpush2.bf16.msra.mxu0 0
        %846 = vmatprep.subr.bf16.mxu0 0
        %847 = vmatpush2.bf16.msra.mxu0 0
        %848 = vmatprep.mubr.bf16.mxu0 0
        %849 = vmatmul.mubr.bf16.gmra.mxu0 %v518
        %v850 = vpop.f32.mrf.mxu0
        %v851 = vadd.f32 %v571, %v850
        %v852 = vpop.f32.mrf.mxu0
        %v853 = vpop.f32.mrf.mxu0
        %v854 = vadd.f32 %v571, %v853
        %v855 = vpop.f32.mrf.mxu0
        %856 = vmatprep.mubr.bf16.mxu0 0
        %857 = vmatmul.mubr.bf16.gmra.mxu0 %v519
        %v858 = vpop.f32.mrf.mxu0
        %v859 = vadd.f32 %v571, %v858
        %v860 = vpop.f32.mrf.mxu0
        %v861 = vpop.f32.mrf.mxu0
        %v862 = vadd.f32 %v571, %v861
        %v863 = vpop.f32.mrf.mxu0
        %864 = vmatprep.mubr.bf16.mxu0 0
        %865 = vmatmul.mubr.bf16.gmra.mxu0 %v520
        %v866 = vpop.f32.mrf.mxu0
        %v867 = vadd.f32 %v571, %v866
        %v868 = vpop.f32.mrf.mxu0
        %v869 = vpop.f32.mrf.mxu0
        %v870 = vadd.f32 %v571, %v869
        %v871 = vpop.f32.mrf.mxu0
        %872 = vmatprep.mubr.bf16.mxu0 0
        %873 = vmatmul.mubr.bf16.gmra.mxu0 %v521
        %v874 = vpop.f32.mrf.mxu0
        %v875 = vadd.f32 %v571, %v874
        %v876 = vpop.f32.mrf.mxu0
        %v877 = vpop.f32.mrf.mxu0
        %v878 = vadd.f32 %v571, %v877
        %v879 = vpop.f32.mrf.mxu0
        %880 = vmatprep.mubr.bf16.mxu0 0
        %881 = vmatmul.mubr.bf16.gmra.mxu0 %v522
        %v882 = vpop.f32.mrf.mxu0
        %v883 = vadd.f32 %v571, %v882
        %v884 = vpop.f32.mrf.mxu0
        %v885 = vpop.f32.mrf.mxu0
        %v886 = vadd.f32 %v571, %v885
        %v887 = vpop.f32.mrf.mxu0
        %888 = vmatprep.mubr.bf16.mxu0 0
        %889 = vmatmul.mubr.bf16.gmra.mxu0 %v523
        %v890 = vpop.f32.mrf.mxu0
        %v891 = vadd.f32 %v571, %v890
        %v892 = vpop.f32.mrf.mxu0
        %v893 = vpop.f32.mrf.mxu0
        %v894 = vadd.f32 %v571, %v893
        %v895 = vpop.f32.mrf.mxu0
        %896 = vmatprep.mubr.bf16.mxu0 0
        %897 = vmatmul.mubr.bf16.gmra.mxu0 %v524
        %v898 = vpop.f32.mrf.mxu0
        %v899 = vadd.f32 %v571, %v898
        %v900 = vpop.f32.mrf.mxu0
        %v901 = vpop.f32.mrf.mxu0
        %v902 = vadd.f32 %v571, %v901
        %v903 = vpop.f32.mrf.mxu0
        %904 = vmatprep.mubr.bf16.mxu0 0
        %905 = vmatmul.mubr.bf16.gmra.mxu0 %v525
        %v906 = vpop.f32.mrf.mxu0
        %v907 = vadd.f32 %v571, %v906
        %v908 = vpop.f32.mrf.mxu0
        %v909 = vpop.f32.mrf.mxu0
        %v910 = vadd.f32 %v571, %v909
        %v911 = vpop.f32.mrf.mxu0
        %912 = vdwg.mxu0
        %v913 = vpack.c.bf16 %v742, %v738
        %v914 = vpack.c.bf16 %v744, %v740
        %v915 = vpack.c.bf16 %v854, %v851
        %v916 = vpack.c.bf16 %v752, %v748
        %v917 = vpack.c.bf16 %v754, %v750
        %v918 = vpack.c.bf16 %v862, %v859
        %v919 = vpack.c.bf16 %v762, %v758
        %v920 = vpack.c.bf16 %v764, %v760
        %v921 = vpack.c.bf16 %v870, %v867
        %v922 = vpack.c.bf16 %v772, %v768
        %v923 = vpack.c.bf16 %v774, %v770
        %v924 = vpack.c.bf16 %v878, %v875
        %v925 = vpack.c.bf16 %v782, %v778
        %v926 = vpack.c.bf16 %v784, %v780
        %v927 = vpack.c.bf16 %v886, %v883
        %v928 = vpack.c.bf16 %v792, %v788
        %v929 = vpack.c.bf16 %v794, %v790
        %v930 = vpack.c.bf16 %v894, %v891
        %v931 = vpack.c.bf16 %v802, %v798
        %v932 = vpack.c.bf16 %v804, %v800
        %v933 = vpack.c.bf16 %v902, %v899
        %v934 = vpack.c.bf16 %v812, %v808
        %v935 = vpack.c.bf16 %v814, %v810
        %v936 = vpack.c.bf16 %v910, %v907
        %v961 = vunpack.c.l.b16 %v913
        %v962 = vunpack.c.l.b16 %v914
        %v963 = vunpack.c.l.b16 %v915
        %v964 = vunpack.c.h.b16 %v913
        %v965 = vunpack.c.h.b16 %v914
        %v966 = vunpack.c.h.b16 %v915
        %v967 = vunpack.c.l.b16 %v916
        %v968 = vunpack.c.l.b16 %v917
        %v969 = vunpack.c.l.b16 %v918
        %v970 = vunpack.c.h.b16 %v916
        %v971 = vunpack.c.h.b16 %v917
        %v972 = vunpack.c.h.b16 %v918
        %v973 = vunpack.c.l.b16 %v919
        %v974 = vunpack.c.l.b16 %v920
        %v975 = vunpack.c.l.b16 %v921
        %v976 = vunpack.c.h.b16 %v919
        %v977 = vunpack.c.h.b16 %v920
        %v978 = vunpack.c.h.b16 %v921
        %v979 = vunpack.c.l.b16 %v922
        %v980 = vunpack.c.l.b16 %v923
        %v981 = vunpack.c.l.b16 %v924
        %v982 = vunpack.c.h.b16 %v922
        %v983 = vunpack.c.h.b16 %v923
        %v984 = vunpack.c.h.b16 %v924
        %v985 = vunpack.c.l.b16 %v925
        %v986 = vunpack.c.l.b16 %v926
        %v987 = vunpack.c.l.b16 %v927
        %v988 = vunpack.c.h.b16 %v925
        %v989 = vunpack.c.h.b16 %v926
        %v990 = vunpack.c.h.b16 %v927
        %v991 = vunpack.c.l.b16 %v928
        %v992 = vunpack.c.l.b16 %v929
        %v993 = vunpack.c.l.b16 %v930
        %v994 = vunpack.c.h.b16 %v928
        %v995 = vunpack.c.h.b16 %v929
        %v996 = vunpack.c.h.b16 %v930
        %v997 = vunpack.c.l.b16 %v931
        %v998 = vunpack.c.l.b16 %v932
        %v999 = vunpack.c.l.b16 %v933
        %v1000 = vunpack.c.h.b16 %v931
        %v1001 = vunpack.c.h.b16 %v932
        %v1002 = vunpack.c.h.b16 %v933
        %v1003 = vunpack.c.l.b16 %v934
        %v1004 = vunpack.c.l.b16 %v935
        %v1005 = vunpack.c.l.b16 %v936
        %v1006 = vunpack.c.h.b16 %v934
        %v1007 = vunpack.c.h.b16 %v935
        %v1008 = vunpack.c.h.b16 %v936
        %v1009 = vpack.c.b16 %v962, %v961
        %v1010 = vpack.c.b16 %v963, %v963
        %v1011 = vpack.c.b16 %v965, %v964
        %v1012 = vpack.c.b16 %v966, %v966
        %v1013 = vpack.c.b16 %v968, %v967
        %v1014 = vpack.c.b16 %v969, %v969
        %v1015 = vpack.c.b16 %v971, %v970
        %v1016 = vpack.c.b16 %v972, %v972
        %v1017 = vpack.c.b16 %v974, %v973
        %v1018 = vpack.c.b16 %v975, %v975
        %v1019 = vpack.c.b16 %v977, %v976
        %v1020 = vpack.c.b16 %v978, %v978
        %v1021 = vpack.c.b16 %v980, %v979
        %v1022 = vpack.c.b16 %v981, %v981
        %v1023 = vpack.c.b16 %v983, %v982
        %v1024 = vpack.c.b16 %v984, %v984
        %v1025 = vpack.c.b16 %v986, %v985
        %v1026 = vpack.c.b16 %v987, %v987
        %v1027 = vpack.c.b16 %v989, %v988
        %v1028 = vpack.c.b16 %v990, %v990
        %v1029 = vpack.c.b16 %v992, %v991
        %v1030 = vpack.c.b16 %v993, %v993
        %v1031 = vpack.c.b16 %v995, %v994
        %v1032 = vpack.c.b16 %v996, %v996
        %v1033 = vpack.c.b16 %v998, %v997
        %v1034 = vpack.c.b16 %v999, %v999
        %v1035 = vpack.c.b16 %v1001, %v1000
        %v1036 = vpack.c.b16 %v1002, %v1002
        %v1037 = vpack.c.b16 %v1004, %v1003
        %v1038 = vpack.c.b16 %v1005, %v1005
        %v1039 = vpack.c.b16 %v1007, %v1006
        %v1040 = vpack.c.b16 %v1008, %v1008
        %1073 = vst [vmem:[%s275] sm:$0xff] %v1009
        %1074 = vst [vmem:[%s275 + $0x8] sm:$0xf] %v1010
        %1075 = vst [vmem:[%s275 + $0xc] sm:$0xff] %v1011
        %1076 = vst [vmem:[%s275 + $0x14] sm:$0xf] %v1012
        %1077 = vst [vmem:[%s275 + $0x18] sm:$0xff] %v1013
        %1078 = vst [vmem:[%s275 + $0x20] sm:$0xf] %v1014
        %1079 = vst [vmem:[%s275 + $0x24] sm:$0xff] %v1015
        %1080 = vst [vmem:[%s275 + $0x2c] sm:$0xf] %v1016
        %1081 = vst [vmem:[%s275 + $0x30] sm:$0xff] %v1017
        %1082 = vst [vmem:[%s275 + $0x38] sm:$0xf] %v1018
        %1083 = vst [vmem:[%s275 + $0x3c] sm:$0xff] %v1019
        %1084 = vst [vmem:[%s275 + $0x44] sm:$0xf] %v1020
        %1085 = vst [vmem:[%s275 + $0x48] sm:$0xff] %v1021
        %1086 = vst [vmem:[%s275 + $0x50] sm:$0xf] %v1022
        %1087 = vst [vmem:[%s275 + $0x54] sm:$0xff] %v1023
        %1088 = vst [vmem:[%s275 + $0x5c] sm:$0xf] %v1024
        %1089 = vst [vmem:[%s275 + $0x60] sm:$0xff] %v1025
        %1090 = vst [vmem:[%s275 + $0x68] sm:$0xf] %v1026
        %1091 = vst [vmem:[%s275 + $0x6c] sm:$0xff] %v1027
        %1092 = vst [vmem:[%s275 + $0x74] sm:$0xf] %v1028
        %1093 = vst [vmem:[%s275 + $0x78] sm:$0xff] %v1029
        %1094 = vst [vmem:[%s275 + $0x80] sm:$0xf] %v1030
        %1095 = vst [vmem:[%s275 + $0x84] sm:$0xff] %v1031
        %1096 = vst [vmem:[%s275 + $0x8c] sm:$0xf] %v1032
        %1097 = vst [vmem:[%s275 + $0x90] sm:$0xff] %v1033
        %1098 = vst [vmem:[%s275 + $0x98] sm:$0xf] %v1034
        %1099 = vst [vmem:[%s275 + $0x9c] sm:$0xff] %v1035
        %1100 = vst [vmem:[%s275 + $0xa4] sm:$0xf] %v1036
        %1101 = vst [vmem:[%s275 + $0xa8] sm:$0xff] %v1037
        %1102 = vst [vmem:[%s275 + $0xb0] sm:$0xf] %v1038
        %1103 = vst [vmem:[%s275 + $0xb4] sm:$0xff] %v1039
        %1104 = vst [vmem:[%s275 + $0xbc] sm:$0xf] %v1040
        %s1105 = sand.u32 %s157, 1
        %s1106 = scalar_lea.sflag [#allocation4], %s1105
        %s1107 = sand.u32 %s157, 1
        %s1108 = smul.addr %s1107, 192
        %s1109 = scalar_lea.vmem [#allocation7], %s1108
        // Predicated region
        $region49: #{tpu_custom_call.1} parent=39 // pred_check
          %p1110 = pneg %p167
        $region50: #{tpu_custom_call.1} parent=39 // pred_check_branch
          %1112 = sbr.rel (%p1110) target = $region52
        $region51: #{tpu_custom_call.1} parent=39 // pred_region
          %s1113 = smul.u32 16, %s28
          %s1115 = ssub.s32 3072, 3072
          %1116 = vsyncadd %s1106, %s1115
          %s1117 = smul.addr %s1113, 3
          %s1118 = smul.addr %s27, 48
          %s1119 = sadd.s32 %s1117, %s1118
          %s1120 = smul.addr %s1119, 64
          %s1121 = scalar_lea.hbm %s5, %s1120
          %s1122 = sshll.u32 %s1109, 4
          %s1123 = int_to_ptr.vmem [resolvable:$true] %s1122
          %1128 = dma.vmem_to_hbm [thread:$0]  %s1123, 3072, %s1121, %s1106, 192, 192, 12
        $region52: #{tpu_custom_call.1} parent=39 // pred_fallthru
          _
      $region40: #{tpu_custom_call.1} parent=5 // pred_fallthru
        _
      %p1129 = scmp.le.s32.totalorder 2, %s18
      // Predicated region
      $region53: #{tpu_custom_call.1} parent=5 // pred_check
        %p1130 = pneg %p1129
      $region54: #{tpu_custom_call.1} parent=5 // pred_check_branch
        %1132 = sbr.rel (%p1130) target = $region56
      $region55: #{tpu_custom_call.1} parent=5 // pred_region
        %s1133 = ssub.s32 %s18, 2
        // Predicated region
        $region57: #{tpu_custom_call.1} parent=55 // pred_check
          %p1134 = pneg %p173
        $region58: #{tpu_custom_call.1} parent=55 // pred_check_branch
          %1136 = sbr.rel (%p1134) target = $region60
        $region59: #{tpu_custom_call.1} parent=55 // pred_region
          %s1137 = sand.u32 %s158, 1
          %s1138 = scalar_lea.sflag [#allocation4], %s1137
          %s1139 = sand.u32 %s158, 1
          %s1140 = smul.addr %s1139, 192
          %s1141 = scalar_lea.vmem [#allocation7], %s1140
          %1142 = dma.done %s1138, 3072
        $region60: #{tpu_custom_call.1} parent=55 // pred_fallthru
          _
      $region56: #{tpu_custom_call.1} parent=5 // pred_fallthru
        _
    $region6: #{tpu_custom_call.1} parent=1 // loop_footer
      %s22 = sadd.s32 1, %s18
    $region7: #{tpu_custom_call.1} parent=1 // loop_footer_branch
      %17 = sbr.rel target = $region3
    $region8: #{tpu_custom_call.1} parent=1 // loop_exit
      _
    %1143 = vsyncpa [#allocation3], 1
    %s1144 = scalar_lea.sflag [#allocation3], 1
    %1145 = vsyncpa %s1144, 1
    %1146 = vsyncpa [#allocation6], 1
    %1147 = vsyncpa [#allocation4], 1
    %s1148 = scalar_lea.sflag [#allocation4], 1
    %1149 = vsyncpa %s1148, 1

</llo_original>
